<compile_context>
chip_gen: v5e
topology: v5e:2x2
jax: 0.10.0
libtpu: 0.0.40
codegen_flags: <defaults>
</compile_context>

<pallas_src>
import jax
import jax.numpy as jnp
from jax import lax
from jax.experimental import pallas as pl
from jax.experimental.pallas import tpu as pltpu


def _round_up(x, m):
    return ((x + m - 1) // m) * m


# ----------------------------------------------------------------------------
# Path A: VMEM-resident table, one-hot @ table on the MXU (vocab chunked).
# ----------------------------------------------------------------------------
def _make_resident_kernel(vocab_size, vocab_chunk):
    def kernel(ids_ref, table_ref, out_ref):
        # ids_ref:   (TN, 1) int32 token ids for this token tile
        # table_ref: (V, D)  full embedding table, resident in VMEM
        # out_ref:   (TN, D) gathered embeddings
        ids = ids_ref[...]                                   # (TN, 1)
        tn = ids.shape[0]

        acc = None
        start = 0
        while start < vocab_size:                            # static chunk loop
            width = min(vocab_chunk, vocab_size - start)
            col = lax.broadcasted_iota(jnp.int32, (tn, width), 1) + start
            onehot = (ids == col).astype(table_ref.dtype)    # 0/1, exact in bf16
            part = jnp.dot(onehot, table_ref[start:start + width, :],
                           preferred_element_type=jnp.float32)
            acc = part if acc is None else acc + part        # exactly one hit/row
            start += width

        out_ref[...] = acc.astype(out_ref.dtype)

    return kernel


# ----------------------------------------------------------------------------
# Path B: table in HBM, scalar-prefetched ids in SMEM, per-row DMA gather.
# ----------------------------------------------------------------------------
_GATHER_INFLIGHT = 8  # ring of outstanding row DMAs


def _gather_kernel(ids_ref, table_hbm, out_ref, sems):
    # ids_ref:   (N_pad,) int32 in SMEM (scalar prefetch)
    # table_hbm: (V, D) embedding table, left in HBM (memory_space=pl.ANY)
    # out_ref:   (TN, D) VMEM output tile; rows are DMA'd straight from HBM
    # sems:      (_GATHER_INFLIGHT,) DMA semaphores (ring)
    tile = pl.program_id(0)
    tn = out_ref.shape[0]
    base = tile * tn

    def row_copy(dst_row, src_row, slot):
        return pltpu.make_async_copy(
            table_hbm.at[pl.ds(src_row, 1), :],
            out_ref.at[pl.ds(dst_row, 1), :],
            sems.at[slot],
        )

    # Prime the ring of outstanding row gathers.
    for s in range(min(_GATHER_INFLIGHT, tn)):
        row_copy(s, ids_ref[base + s], s % _GATHER_INFLIGHT).start()

    def body(s, carry):
        slot = s % _GATHER_INFLIGHT
        nxt = s + _GATHER_INFLIGHT
        # Read the next row id BEFORE the wait (keeps SMEM sld ahead of the DMA wait).
        next_src = ids_ref[base + jnp.minimum(nxt, tn - 1)]
        # Wait for row s (all row copies have identical (1, D) shape).
        pltpu.make_async_copy(table_hbm.at[pl.ds(0, 1), :],
                              out_ref.at[pl.ds(0, 1), :],
                              sems.at[slot]).wait()

        @pl.when(nxt < tn)
        def _():
            row_copy(nxt, next_src, slot).start()

        return carry

    lax.fori_loop(0, tn, body, 0)


# ----------------------------------------------------------------------------
# Wrapper
# ----------------------------------------------------------------------------
def word_encoder_forward(x_ids, embed_table, *, token_tile=256, vocab_chunk=512,
                         force_gather=False):
    """x_ids: (B, S) int ids; embed_table: (V, D) -> (B, S, D) in table dtype."""
    b, s = x_ids.shape
    v, d = embed_table.shape
    itemsize = jnp.dtype(embed_table.dtype).itemsize

    # --- token axis: flatten + pad ids (never the table) to a token_tile multiple
    n = b * s
    token_tile = max(128, _round_up(int(token_tile), 128))          # MXU/bf16 aligned
    token_tile = min(token_tile, max(128, _round_up(n, 128)))       # don't over-pad tiny inputs
    n_pad = _round_up(n, token_tile)
    num_token_tiles = n_pad // token_tile

    ids_flat = x_ids.reshape(n).astype(jnp.int32)
    if n_pad != n:
        ids_flat = jnp.pad(ids_flat, (0, n_pad - n))                # pad ids -> row 0 (valid)

    # --- path choice: resident one-hot@table vs HBM DMA gather ---
    try:
        vmem_cap = int(pltpu.get_tpu_info().vmem_capacity_bytes)
    except Exception:
        vmem_cap = 64 << 20                                          # conservative (v7x per-TC)
    budget = min(40 << 20, (vmem_cap * 5) // 8)

    chunk = max(8, min(int(vocab_chunk), v))
    chunk = max(8, (chunk // 8) * 8)
    table_bytes = v * d * itemsize
    resident_need = (
        2 * table_bytes                                   # table (conservatively 2-buffered)
        + 2 * token_tile * d * itemsize                   # double-buffered output tile
        + 2 * token_tile * 128 * 4                        # ids tile (lane-padded to 128)
        + token_tile * chunk * max(itemsize, 4)           # one-hot chunk
        + token_tile * d * 4                              # f32 accumulator
    )
    use_gather = force_gather or (resident_need > budget)

    out_shape = jax.ShapeDtypeStruct((n_pad, d), embed_table.dtype)

    if use_gather:
        # -------- Path B: DMA gather, table stays in HBM --------
        cost = pl.CostEstimate(
            flops=0,
            transcendentals=0,
            bytes_accessed=n_pad * 4 + 2 * n_pad * d * itemsize,
        )
        out = pl.pallas_call(
            _gather_kernel,
            out_shape=out_shape,
            grid_spec=pltpu.PrefetchScalarGridSpec(
                num_scalar_prefetch=1,                                # ids -> SMEM
                grid=(num_token_tiles,),
                in_specs=[pl.BlockSpec(memory_space=pl.ANY)],         # table stays in HBM
                out_specs=pl.BlockSpec((token_tile, d), lambda i, ids: (i, 0)),
                scratch_shapes=[pltpu.SemaphoreType.DMA((_GATHER_INFLIGHT,))],
            ),
            compiler_params=pltpu.CompilerParams(
                dimension_semantics=("arbitrary",),
            ),
            cost_estimate=cost,
        )(ids_flat, embed_table)
    else:
        # -------- Path A: resident table, chunked one-hot @ table --------
        ids_col = ids_flat.reshape(n_pad, 1)
        vmem_limit = None
        if resident_need > (12 << 20):
            vmem_limit = int(min(resident_need + (4 << 20), 48 << 20))
        cost = pl.CostEstimate(
            flops=2 * n_pad * v * d,
            transcendentals=0,
            bytes_accessed=n_pad * 4 + table_bytes + n_pad * d * itemsize,
        )
        out = pl.pallas_call(
            _make_resident_kernel(v, chunk),
            out_shape=out_shape,
            grid_spec=pltpu.PrefetchScalarGridSpec(
                num_scalar_prefetch=0,
                grid=(num_token_tiles,),
                in_specs=[
                    pl.BlockSpec((token_tile, 1), lambda i: (i, 0)),  # ids tile
                    pl.BlockSpec((v, d), lambda i: (0, 0)),           # whole table, resident
                ],
                out_specs=pl.BlockSpec((token_tile, d), lambda i: (i, 0)),
            ),
            compiler_params=pltpu.CompilerParams(
                dimension_semantics=("parallel",),
                vmem_limit_bytes=vmem_limit,
            ),
            cost_estimate=cost,
        )(ids_col, embed_table)

    return out[:n].reshape(b, s, d)


if __name__ == "__main__":
    # kwargs['embed_mod']['args'] = dict(num_embeddings=VOCAB, embedding_dim=EMBED_DIM)
    VOCAB, EMBED_DIM, BATCH, SEQ = 32, 128, 2, 8

    key = jax.random.PRNGKey(0)
    k_tab, k_ids, k_tab2, k_ids2 = jax.random.split(key, 4)

    # nn.Embedding default init: weight ~ N(0, 1)
    embed_table = jax.random.normal(k_tab, (VOCAB, EMBED_DIM), dtype=jnp.float32)
    x_ids = jax.random.randint(k_ids, (BATCH, SEQ), 0, VOCAB, dtype=jnp.int32)

    # 1) resident-table MXU path (default for small tables)
    y = jax.block_until_ready(word_encoder_forward(x_ids, embed_table))
    y_ref = embed_table[x_ids]
    assert y.shape == (BATCH, SEQ, EMBED_DIM)
    assert jnp.allclose(y, y_ref, atol=1e-6), "mismatch vs reference (resident path)"

    # 2) HBM DMA-gather path (forced; this is what large vocabularies use)
    V2, D2 = 64, 256
    table2 = jax.random.normal(k_tab2, (V2, D2), dtype=jnp.float32)
    x2 = jax.random.randint(k_ids2, (BATCH, SEQ), 0, V2, dtype=jnp.int32)
    y2 = jax.block_until_ready(word_encoder_forward(x2, table2, force_gather=True))
    assert jnp.allclose(y2, table2[x2], atol=1e-6), "mismatch vs reference (gather path)"

    # 3) bf16 table + chunked vocab loop inside the resident kernel
    table3 = embed_table.astype(jnp.bfloat16)
    y3 = jax.block_until_ready(word_encoder_forward(x_ids, table3, vocab_chunk=16))
    assert jnp.allclose(y3.astype(jnp.float32), table3[x_ids].astype(jnp.float32)), \
        "mismatch vs reference (bf16 chunked path)"

    print("KERNEL_OK")
</pallas_src>

<mosaic_0001>
module attributes {stable_mosaic.version = 11 : i64} {
  func.func @kernel(%arg0: i32, %arg1: memref<128x1xi32, #tpu.memory_space<vmem>>, %arg2: memref<32x128xf32, #tpu.memory_space<vmem>>, %arg3: memref<128x128xf32, #tpu.memory_space<vmem>>) attributes {dimension_semantics = [#tpu.dimension_semantics<parallel>], iteration_bounds = array<i64: 1>, scalar_prefetch = 0 : i64, scratch_operands = 0 : i64, tpu.core_type = #tpu.core_type<tc>, window_params = [{transform_indices = @transform_0, window_bounds = array<i64: 128, 1>}, {pipeline_mode = #tpu.pipeline_mode<synchronous>, transform_indices = @transform_1, window_bounds = array<i64: 32, 128>}, {transform_indices = @transform_2, window_bounds = array<i64: 128, 128>}]} {
    %c0 = arith.constant 0 : index
    %c0_0 = arith.constant 0 : index
    %0 = vector.load %arg1[%c0, %c0_0] : memref<128x1xi32, #tpu.memory_space<vmem>>, vector<128x1xi32>
    %1 = tpu.iota {dimensions = array<i32: 1>} : vector<128x32xi32>
    %c0_i32 = arith.constant 0 : i32
    %2 = vector.broadcast %c0_i32 : i32 to vector<128x32xi32>
    %3 = arith.addi %1, %2 : vector<128x32xi32>
    %4 = vector.broadcast %0 : vector<128x1xi32> to vector<128x32xi32>
    %5 = arith.cmpi eq, %4, %3 : vector<128x32xi32>
    %6 = arith.extui %5 : vector<128x32xi1> to vector<128x32xi32>
    %7 = arith.sitofp %6 : vector<128x32xi32> to vector<128x32xf32>
    %c0_1 = arith.constant 0 : index
    %c0_2 = arith.constant 0 : index
    %8 = vector.load %arg2[%c0_1, %c0_2] : memref<32x128xf32, #tpu.memory_space<vmem>>, vector<32x128xf32>
    %cst = arith.constant dense<0.000000e+00> : vector<128x128xf32>
    %9 = tpu.matmul %7, %8, %cst {dimension_numbers = #tpu.dot_dimension_numbers<[1], [0], [0], [1], [0, 0, 1, 1], [], []>} : vector<128x32xf32>, vector<32x128xf32>, vector<128x128xf32> -> vector<128x128xf32>
    %c0_3 = arith.constant 0 : index
    %c0_4 = arith.constant 0 : index
    %10 = vector.load %arg3[%c0_3, %c0_4] : memref<128x128xf32, #tpu.memory_space<vmem>>, vector<128x128xf32>
    tpu.vector_store %arg3[%c0_3, %c0_4], %9 {strides = array<i32>} : memref<128x128xf32, #tpu.memory_space<vmem>>, vector<128x128xf32>,
    return
  }
  func.func @transform_0(%arg0: i32) -> (i32, i32) {
    %c0_i32 = arith.constant 0 : i32
    %c0_i32_0 = arith.constant 0 : i32
    return %arg0, %c0_i32 : i32, i32
  }
  func.func @transform_1(%arg0: i32) -> (i32, i32) {
    %c0_i32 = arith.constant 0 : i32
    %c0_i32_0 = arith.constant 0 : i32
    %c0_i32_1 = arith.constant 0 : i32
    return %c0_i32, %c0_i32_0 : i32, i32
  }
  func.func @transform_2(%arg0: i32) -> (i32, i32) {
    %c0_i32 = arith.constant 0 : i32
    %c0_i32_0 = arith.constant 0 : i32
    return %arg0, %c0_i32 : i32, i32
  }
}

</mosaic_0001>

<llo_original>
// kernel: tpu_custom_call.1
$region0: #{tpu_custom_call.1}
  #allocation0 [shape = 'u32[]', space=smem, size = 0x4, offset = 0x4, fixed_abs, tag = 'smem constant byte address 0x4 - core index']
  #allocation1 [shape = 'u32[72,128]{1,0:T(1,128)}', space=vmem, size = 0x9000, scoped, tag = 'internal scratch']
  %s0 = inlined_call_operand.vmem [shape: s32[128,1], index: 0, kind: input, shape index: {}]
  %s1 = inlined_call_operand.vmem [shape: f32[32,128], index: 1, kind: input, shape index: {}]
  %s2 = inlined_call_operand.hbm [shape: f32[128,128], index: 2, kind: output, shape index: {}]
  %s3 = sld [smem:[#allocation0]]
  $region18: #{tpu_custom_call.1} parent=0
    _
  %s5 = ssub.s32 1, %s3
  %s6 = scalar_select 0, %s5, %s3
  $region1: #{tpu_custom_call.1} parent=0
    #allocation2 [shape = 'u8[65536]{0}', space=vmem, size = 0x10000, scoped, tag = 'output window, operand 0, single buffered']
    #allocation3 [shape = 's32[1]{0}', space=sflag, size = 0x4, scoped, tag = 'scoped memory for tpu_custom_call.1']
    %7 = vsyncpa [#allocation3], 0
    // Predicated region
    $region2: #{tpu_custom_call.1} parent=1 // pred_check
      _
    $region3: #{tpu_custom_call.1} parent=1 // pred_check_branch
      %9 = sbr.rel (0) target = $region5
    $region4: #{tpu_custom_call.1} parent=1 // pred_region
      _
    $region5: #{tpu_custom_call.1} parent=1 // pred_fallthru
      _
    // Predicated region
    $region6: #{tpu_custom_call.1} parent=1 // pred_check
      _
    $region7: #{tpu_custom_call.1} parent=1 // pred_check_branch
      %11 = sbr.rel (0) target = $region9
    $region8: #{tpu_custom_call.1} parent=1 // pred_region
      _
    $region9: #{tpu_custom_call.1} parent=1 // pred_fallthru
      _
    %v12 = vld [vmem:[%s0] sm:$0xff]
    %v13 = vld [vmem:[%s0 + $0x8] sm:$0xff]
    %v14 = vld [vmem:[%s0 + $0x10] sm:$0xff]
    %v15 = vld [vmem:[%s0 + $0x18] sm:$0xff]
    %v16 = vld [vmem:[%s0 + $0x20] sm:$0xff]
    %v17 = vld [vmem:[%s0 + $0x28] sm:$0xff]
    %v18 = vld [vmem:[%s0 + $0x30] sm:$0xff]
    %v19 = vld [vmem:[%s0 + $0x38] sm:$0xff]
    %v20 = vld [vmem:[%s0 + $0x40] sm:$0xff]
    %v21 = vld [vmem:[%s0 + $0x48] sm:$0xff]
    %v22 = vld [vmem:[%s0 + $0x50] sm:$0xff]
    %v23 = vld [vmem:[%s0 + $0x58] sm:$0xff]
    %v24 = vld [vmem:[%s0 + $0x60] sm:$0xff]
    %v25 = vld [vmem:[%s0 + $0x68] sm:$0xff]
    %v26 = vld [vmem:[%s0 + $0x70] sm:$0xff]
    %v27 = vld [vmem:[%s0 + $0x78] sm:$0xff]
    %v28 = vlaneseq
    %v29 = vand.u32 %v28, 127
    %30 = vset.pattern.permute.xlu0 0
    %31 = vperm.xlu0 %30, %v12
    %v32 = vpop.permute.xlu0 %31
    %33 = vset.pattern.permute.xlu0 0
    %34 = vperm.xlu0 %33, %v13
    %v35 = vpop.permute.xlu0 %34
    %36 = vset.pattern.permute.xlu0 0
    %37 = vperm.xlu0 %36, %v14
    %v38 = vpop.permute.xlu0 %37
    %39 = vset.pattern.permute.xlu0 0
    %40 = vperm.xlu0 %39, %v15
    %v41 = vpop.permute.xlu0 %40
    %42 = vset.pattern.permute.xlu0 0
    %43 = vperm.xlu0 %42, %v16
    %v44 = vpop.permute.xlu0 %43
    %45 = vset.pattern.permute.xlu0 0
    %46 = vperm.xlu0 %45, %v17
    %v47 = vpop.permute.xlu0 %46
    %48 = vset.pattern.permute.xlu0 0
    %49 = vperm.xlu0 %48, %v18
    %v50 = vpop.permute.xlu0 %49
    %51 = vset.pattern.permute.xlu0 0
    %52 = vperm.xlu0 %51, %v19
    %v53 = vpop.permute.xlu0 %52
    %54 = vset.pattern.permute.xlu0 0
    %55 = vperm.xlu0 %54, %v20
    %v56 = vpop.permute.xlu0 %55
    %57 = vset.pattern.permute.xlu0 0
    %58 = vperm.xlu0 %57, %v21
    %v59 = vpop.permute.xlu0 %58
    %60 = vset.pattern.permute.xlu0 0
    %61 = vperm.xlu0 %60, %v22
    %v62 = vpop.permute.xlu0 %61
    %63 = vset.pattern.permute.xlu0 0
    %64 = vperm.xlu0 %63, %v23
    %v65 = vpop.permute.xlu0 %64
    %66 = vset.pattern.permute.xlu0 0
    %67 = vperm.xlu0 %66, %v24
    %v68 = vpop.permute.xlu0 %67
    %69 = vset.pattern.permute.xlu0 0
    %70 = vperm.xlu0 %69, %v25
    %v71 = vpop.permute.xlu0 %70
    %72 = vset.pattern.permute.xlu0 0
    %73 = vperm.xlu0 %72, %v26
    %v74 = vpop.permute.xlu0 %73
    %75 = vset.pattern.permute.xlu0 0
    %76 = vperm.xlu0 %75, %v27
    %v77 = vpop.permute.xlu0 %76
    %vm78 = vcmp.eq.s32.totalorder %v32, %v29
    %vm79 = vcmp.eq.s32.totalorder %v35, %v29
    %vm80 = vcmp.eq.s32.totalorder %v38, %v29
    %vm81 = vcmp.eq.s32.totalorder %v41, %v29
    %vm82 = vcmp.eq.s32.totalorder %v44, %v29
    %vm83 = vcmp.eq.s32.totalorder %v47, %v29
    %vm84 = vcmp.eq.s32.totalorder %v50, %v29
    %vm85 = vcmp.eq.s32.totalorder %v53, %v29
    %vm86 = vcmp.eq.s32.totalorder %v56, %v29
    %vm87 = vcmp.eq.s32.totalorder %v59, %v29
    %vm88 = vcmp.eq.s32.totalorder %v62, %v29
    %vm89 = vcmp.eq.s32.totalorder %v65, %v29
    %vm90 = vcmp.eq.s32.totalorder %v68, %v29
    %vm91 = vcmp.eq.s32.totalorder %v71, %v29
    %vm92 = vcmp.eq.s32.totalorder %v74, %v29
    %vm93 = vcmp.eq.s32.totalorder %v77, %v29
    %v94 = vsel %vm78, 1, 0
    %v95 = vsel %vm79, 1, 0
    %v96 = vsel %vm80, 1, 0
    %v97 = vsel %vm81, 1, 0
    %v98 = vsel %vm82, 1, 0
    %v99 = vsel %vm83, 1, 0
    %v100 = vsel %vm84, 1, 0
    %v101 = vsel %vm85, 1, 0
    %v102 = vsel %vm86, 1, 0
    %v103 = vsel %vm87, 1, 0
    %v104 = vsel %vm88, 1, 0
    %v105 = vsel %vm89, 1, 0
    %v106 = vsel %vm90, 1, 0
    %v107 = vsel %vm91, 1, 0
    %v108 = vsel %vm92, 1, 0
    %v109 = vsel %vm93, 1, 0
    %v110 = vcvt.s32.f32 %v94
    %v111 = vcvt.s32.f32 %v95
    %v112 = vcvt.s32.f32 %v96
    %v113 = vcvt.s32.f32 %v97
    %v114 = vcvt.s32.f32 %v98
    %v115 = vcvt.s32.f32 %v99
    %v116 = vcvt.s32.f32 %v100
    %v117 = vcvt.s32.f32 %v101
    %v118 = vcvt.s32.f32 %v102
    %v119 = vcvt.s32.f32 %v103
    %v120 = vcvt.s32.f32 %v104
    %v121 = vcvt.s32.f32 %v105
    %v122 = vcvt.s32.f32 %v106
    %v123 = vcvt.s32.f32 %v107
    %v124 = vcvt.s32.f32 %v108
    %v125 = vcvt.s32.f32 %v109
    %v126 = vld [vmem:[%s1] sm:$0xff]
    %v127 = vld [vmem:[%s1 + $0x8] sm:$0xff]
    %v128 = vld [vmem:[%s1 + $0x10] sm:$0xff]
    %v129 = vld [vmem:[%s1 + $0x18] sm:$0xff]
    %vm130 = vcmask 261120
    %v132 = vsel %vm130, %v110, 0
    %v135 = vsel %vm130, %v111, 0
    %v138 = vsel %vm130, %v112, 0
    %v141 = vsel %vm130, %v113, 0
    %v144 = vsel %vm130, %v114, 0
    %v147 = vsel %vm130, %v115, 0
    %v150 = vsel %vm130, %v116, 0
    %v153 = vsel %vm130, %v117, 0
    %v156 = vsel %vm130, %v118, 0
    %v159 = vsel %vm130, %v119, 0
    %v162 = vsel %vm130, %v120, 0
    %v165 = vsel %vm130, %v121, 0
    %v168 = vsel %vm130, %v122, 0
    %v171 = vsel %vm130, %v123, 0
    %v174 = vsel %vm130, %v124, 0
    %v177 = vsel %vm130, %v125, 0
    %179 = vmatpush.msra.mxu0 0.0
    %180 = vmatpush.msra.mxu0 0.0
    %181 = vmatpush.msra.mxu0 0.0
    %182 = vmatpush.msra.mxu0 0.0
    %183 = vmatpush.msra.mxu0 0.0
    %184 = vmatpush.msra.mxu0 0.0
    %185 = vmatpush.msra.mxu0 0.0
    %186 = vmatpush.msra.mxu0 0.0
    %187 = vmatpush.msra.mxu0 0.0
    %188 = vmatpush.msra.mxu0 0.0
    %189 = vmatpush.msra.mxu0 0.0
    %190 = vmatpush.msra.mxu0 0.0
    %191 = vmatpush.msra.mxu0 %v129
    %192 = vmatpush.msra.mxu0 %v128
    %193 = vmatpush.msra.mxu0 %v127
    %194 = vmatpush.msra.mxu0 %v126
    %195 = vmatmul.f32.gmra.mxu0 %v132
    %v196 = vpop.f32.mrf.mxu0
    %v197 = vadd.f32 0.0, %v196
    %198 = vmatmul.f32.gmra.mxu0 %v135
    %v199 = vpop.f32.mrf.mxu0
    %v200 = vadd.f32 0.0, %v199
    %201 = vmatmul.f32.gmra.mxu0 %v138
    %v202 = vpop.f32.mrf.mxu0
    %v203 = vadd.f32 0.0, %v202
    %204 = vmatmul.f32.gmra.mxu0 %v141
    %v205 = vpop.f32.mrf.mxu0
    %v206 = vadd.f32 0.0, %v205
    %207 = vmatmul.f32.gmra.mxu0 %v144
    %v208 = vpop.f32.mrf.mxu0
    %v209 = vadd.f32 0.0, %v208
    %210 = vmatmul.f32.gmra.mxu0 %v147
    %v211 = vpop.f32.mrf.mxu0
    %v212 = vadd.f32 0.0, %v211
    %213 = vmatmul.f32.gmra.mxu0 %v150
    %v214 = vpop.f32.mrf.mxu0
    %v215 = vadd.f32 0.0, %v214
    %216 = vmatmul.f32.gmra.mxu0 %v153
    %v217 = vpop.f32.mrf.mxu0
    %v218 = vadd.f32 0.0, %v217
    %219 = vmatmul.f32.gmra.mxu0 %v156
    %v220 = vpop.f32.mrf.mxu0
    %v221 = vadd.f32 0.0, %v220
    %222 = vmatmul.f32.gmra.mxu0 %v159
    %v223 = vpop.f32.mrf.mxu0
    %v224 = vadd.f32 0.0, %v223
    %225 = vmatmul.f32.gmra.mxu0 %v162
    %v226 = vpop.f32.mrf.mxu0
    %v227 = vadd.f32 0.0, %v226
    %228 = vmatmul.f32.gmra.mxu0 %v165
    %v229 = vpop.f32.mrf.mxu0
    %v230 = vadd.f32 0.0, %v229
    %231 = vmatmul.f32.gmra.mxu0 %v168
    %v232 = vpop.f32.mrf.mxu0
    %v233 = vadd.f32 0.0, %v232
    %234 = vmatmul.f32.gmra.mxu0 %v171
    %v235 = vpop.f32.mrf.mxu0
    %v236 = vadd.f32 0.0, %v235
    %237 = vmatmul.f32.gmra.mxu0 %v174
    %v238 = vpop.f32.mrf.mxu0
    %v239 = vadd.f32 0.0, %v238
    %240 = vmatmul.f32.gmra.mxu0 %v177
    %v241 = vpop.f32.mrf.mxu0
    %v242 = vadd.f32 0.0, %v241
    %243 = vdwg.mxu0
    %244 = vst [vmem:[#allocation2] sm:$0xff] %v197
    %245 = vst [vmem:[#allocation2 + $0x8] sm:$0xff] %v200
    %246 = vst [vmem:[#allocation2 + $0x10] sm:$0xff] %v203
    %247 = vst [vmem:[#allocation2 + $0x18] sm:$0xff] %v206
    %248 = vst [vmem:[#allocation2 + $0x20] sm:$0xff] %v209
    %249 = vst [vmem:[#allocation2 + $0x28] sm:$0xff] %v212
    %250 = vst [vmem:[#allocation2 + $0x30] sm:$0xff] %v215
    %251 = vst [vmem:[#allocation2 + $0x38] sm:$0xff] %v218
    %252 = vst [vmem:[#allocation2 + $0x40] sm:$0xff] %v221
    %253 = vst [vmem:[#allocation2 + $0x48] sm:$0xff] %v224
    %254 = vst [vmem:[#allocation2 + $0x50] sm:$0xff] %v227
    %255 = vst [vmem:[#allocation2 + $0x58] sm:$0xff] %v230
    %256 = vst [vmem:[#allocation2 + $0x60] sm:$0xff] %v233
    %257 = vst [vmem:[#allocation2 + $0x68] sm:$0xff] %v236
    %258 = vst [vmem:[#allocation2 + $0x70] sm:$0xff] %v239
    %259 = vst [vmem:[#allocation2 + $0x78] sm:$0xff] %v242
    // Predicated region
    $region10: #{tpu_custom_call.1} parent=1 // pred_check
      _
    $region11: #{tpu_custom_call.1} parent=1 // pred_check_branch
      %261 = sbr.rel (0) target = $region13
    $region12: #{tpu_custom_call.1} parent=1 // pred_region
      %263 = vsyncadd [#allocation3], 0
      %s264 = sshll.u32 [#allocation2], 4
      %s265 = int_to_ptr.vmem [resolvable:$true] %s264
      %s266 = sshll.u32 %s2, 4
      %s267 = int_to_ptr.hbm [resolvable:$true] %s266
      %272 = dma.vmem_to_hbm [thread:$0]  %s265, 2048, %s267, [#allocation3], 128, 128, 8
    $region13: #{tpu_custom_call.1} parent=1 // pred_fallthru
      _
    // Predicated region
    $region14: #{tpu_custom_call.1} parent=1 // pred_check
      _
    $region15: #{tpu_custom_call.1} parent=1 // pred_check_branch
      %274 = sbr.rel (0) target = $region17
    $region16: #{tpu_custom_call.1} parent=1 // pred_region
      %276 = dma.done [#allocation3], 2048
    $region17: #{tpu_custom_call.1} parent=1 // pred_fallthru
      _
    %277 = vsyncpa [#allocation3], 1

</llo_original>
